<compile_context>
chip_gen: v5e
topology: v5e:2x2
jax: 0.10.0
libtpu: 0.0.40
codegen_flags: <defaults>
</compile_context>

<pallas_src>
import functools

import jax
import jax.numpy as jnp
from jax import lax
from jax.experimental import pallas as pl
from jax.experimental.pallas import tpu as pltpu

BN_EPS = 1e-5
_LANE = 128
_SUBLANE = 8


def _round_up(n, m):
    return ((n + m - 1) // m) * m


def _gelu_exact(x):
    # F.gelu default = exact erf-based GELU.
    return 0.5 * x * (1.0 + lax.erf(x * 0.7071067811865476))


def _vmem_budget_bytes():
    """Generation-aware scoped-VMEM budget (~3/4 of physical, capped at 100 MiB)."""
    cap = None
    try:
        cap = getattr(pltpu.get_tpu_info(), "vmem_capacity_bytes", None)
    except Exception:
        cap = None
    if not cap:
        cap = 64 * 1024 * 1024  # conservative (v7x physical per TC)
    return int(min((cap * 3) // 4, 100 * 1024 * 1024))


def _pick_tb(batch, fin, fout, isz, osz, budget, max_block_b):
    # Resident weights are double-buffered by BlockSpec even though revisited.
    weights = 2 * (fin * fin + fin * fout) * isz
    # Conservative superset of the per-batch-row double-buffered tile bytes of any pass:
    # x-in (twice: compute + residual), y_pre f32 in+out, final out.
    per_row = 2 * (2 * fin * isz + 2 * 4 * fout + osz * fout)
    cap = max(_SUBLANE, min(_round_up(batch, _SUBLANE), _round_up(max_block_b, _SUBLANE)))
    tb = cap
    while tb > _SUBLANE and weights + tb * per_row + (1 << 20) > budget:
        tb = max(_SUBLANE, _round_up(tb // 2, _SUBLANE))
    return tb


# ---------------- pass 1: partial BN0 stats from h = x @ w0 ------------------
def _pass1_kernel(x_ref, w0_ref, stat_ref):
    h = jnp.dot(x_ref[...], w0_ref[...], preferred_element_type=jnp.float32)
    s = jnp.sum(h, axis=0, keepdims=True)
    sq = jnp.sum(h * h, axis=0, keepdims=True)
    pad = jnp.zeros((_SUBLANE - 2, h.shape[1]), jnp.float32)
    stat_ref[...] = jnp.concatenate([s, sq, pad], axis=0)


# ---- pass 2: recompute h, folded BN0 + gelu, y = h @ w1, partial BN1 stats ---
def _pass2_kernel(x_ref, w0_ref, s0_ref, t0_ref, w1_ref, ypre_ref, stat_ref):
    h = jnp.dot(x_ref[...], w0_ref[...], preferred_element_type=jnp.float32)
    a = _gelu_exact(h * s0_ref[...] + t0_ref[...])
    y = jnp.dot(a.astype(w1_ref.dtype), w1_ref[...],
                preferred_element_type=jnp.float32)
    ypre_ref[...] = y
    s = jnp.sum(y, axis=0, keepdims=True)
    sq = jnp.sum(y * y, axis=0, keepdims=True)
    pad = jnp.zeros((_SUBLANE - 2, y.shape[1]), jnp.float32)
    stat_ref[...] = jnp.concatenate([s, sq, pad], axis=0)


# ---------------- pass 3: folded BN1 + gelu (+ residual) ----------------------
def _pass3_kernel(ypre_ref, s1_ref, t1_ref, *rest, residual):
    if residual:
        x_ref, o_ref = rest
    else:
        (o_ref,) = rest
    y = _gelu_exact(ypre_ref[...] * s1_ref[...] + t1_ref[...])
    if residual:
        y = y + x_ref[...].astype(jnp.float32)
    o_ref[...] = y.astype(o_ref.dtype)


# ---------------- wrapper-side stat reduction / BN finalize -------------------
def _reduce_partial_stats(stats):
    st = stats.reshape(-1, _SUBLANE, stats.shape[-1])
    return (jnp.sum(st[:, 0, :], axis=0, keepdims=True),
            jnp.sum(st[:, 1, :], axis=0, keepdims=True))


def _finalize_bn(s, q, gamma, beta, n_valid):
    # NOTE: one-pass E[h^2] - mean^2 with clamp; fine at these tolerances.
    inv_n = 1.0 / float(n_valid)
    mean = s * inv_n
    var = jnp.maximum(q * inv_n - mean * mean, 0.0)
    rstd = lax.rsqrt(var + BN_EPS)
    scale = rstd * gamma
    shift = beta - mean * scale
    return scale, shift


def mlp_forward(x, w0, g0, b0, w1, g1, b1, *, max_block_b=2048):
    B, nin = x.shape
    nout = w1.shape[1]
    assert w0.shape == (nin, nin), "first layer must be (nin, nin)"
    assert w1.shape == (nin, nout), "second layer must be (nin, nout)"
    residual = (nin == nout)

    f32 = jnp.float32
    cdt = jnp.bfloat16 if x.dtype == jnp.bfloat16 else jnp.float32  # MXU operand dtype
    isz = jnp.dtype(cdt).itemsize
    osz = jnp.dtype(x.dtype).itemsize

    fin = _round_up(nin, _LANE)     # lane-dense feature dims
    fout = _round_up(nout, _LANE)

    budget = _vmem_budget_bytes()
    tb = _pick_tb(B, fin, fout, isz, osz, budget, max_block_b)
    bpad = _round_up(B, tb)
    nb = bpad // tb
    n_pad = bpad - B

    # Zero padding invariant: padded x rows / weight rows+cols / gamma / beta are
    # zero -> padded feature lanes stay exactly 0 end-to-end; padded batch rows of
    # h = x @ w0 are exactly 0 (so BN0 sums with divisor B are exact).
    xp = jnp.pad(x, ((0, n_pad), (0, fin - nin))).astype(cdt)
    w0p = jnp.pad(w0, ((0, fin - nin), (0, fin - nin))).astype(cdt)
    w1p = jnp.pad(w1, ((0, fin - nin), (0, fout - nout))).astype(cdt)
    g0p = jnp.pad(g0.astype(f32).reshape(1, nin), ((0, 0), (0, fin - nin)))
    b0p = jnp.pad(b0.astype(f32).reshape(1, nin), ((0, 0), (0, fin - nin)))
    g1p = jnp.pad(g1.astype(f32).reshape(1, nout), ((0, 0), (0, fout - nout)))
    b1p = jnp.pad(b1.astype(f32).reshape(1, nout), ((0, 0), (0, fout - nout)))

    # ---------------- pass 1: BN0 partial stats ----------------
    stat0 = pl.pallas_call(
        _pass1_kernel,
        grid=(nb,),
        in_specs=[
            pl.BlockSpec((tb, fin), lambda i: (i, 0)),     # x tile
            pl.BlockSpec((fin, fin), lambda i: (0, 0)),    # w0 resident
        ],
        out_specs=pl.BlockSpec((_SUBLANE, fin), lambda i: (i, 0)),
        out_shape=jax.ShapeDtypeStruct((nb * _SUBLANE, fin), f32),
        compiler_params=pltpu.CompilerParams(
            dimension_semantics=("parallel",), vmem_limit_bytes=budget),
        cost_estimate=pl.CostEstimate(
            flops=2 * bpad * fin * fin,
            transcendentals=0,
            bytes_accessed=isz * (bpad * fin + fin * fin) + 4 * nb * _SUBLANE * fin),
    )(xp, w0p)

    s0, q0 = _reduce_partial_stats(stat0)
    scale0, shift0 = _finalize_bn(s0, q0, g0p, b0p, B)

    # ---------------- pass 2: y_pre + BN1 partial stats ----------------
    ypre, stat1 = pl.pallas_call(
        _pass2_kernel,
        grid=(nb,),
        in_specs=[
            pl.BlockSpec((tb, fin), lambda i: (i, 0)),     # x tile
            pl.BlockSpec((fin, fin), lambda i: (0, 0)),    # w0 resident
            pl.BlockSpec((1, fin), lambda i: (0, 0)),      # BN0 scale resident
            pl.BlockSpec((1, fin), lambda i: (0, 0)),      # BN0 shift resident
            pl.BlockSpec((fin, fout), lambda i: (0, 0)),   # w1 resident
        ],
        out_specs=(
            pl.BlockSpec((tb, fout), lambda i: (i, 0)),            # y_pre tile
            pl.BlockSpec((_SUBLANE, fout), lambda i: (i, 0)),      # BN1 partial stats
        ),
        out_shape=(
            jax.ShapeDtypeStruct((bpad, fout), f32),
            jax.ShapeDtypeStruct((nb * _SUBLANE, fout), f32),
        ),
        compiler_params=pltpu.CompilerParams(
            dimension_semantics=("parallel",), vmem_limit_bytes=budget),
        cost_estimate=pl.CostEstimate(
            flops=2 * bpad * fin * (fin + fout) + 10 * bpad * fin,
            transcendentals=bpad * fin,
            bytes_accessed=isz * (bpad * fin + fin * fin + fin * fout)
            + 4 * (bpad * fout + nb * _SUBLANE * fout + 4 * fin)),
    )(xp, w0p, scale0, shift0, w1p)

    s1, q1 = _reduce_partial_stats(stat1)
    if n_pad > 0:
        # Padded x rows are exactly zero -> their pass-2 activation row is
        # gelu(shift0) and their y row is gelu(shift0) @ w1 (identical for every
        # padded row).  Subtract that constant contribution from the BN1 sums.
        a_pad = _gelu_exact(shift0)
        y_pad = jnp.dot(a_pad.astype(cdt), w1p, preferred_element_type=f32)
        s1 = s1 - float(n_pad) * y_pad
        q1 = q1 - float(n_pad) * (y_pad * y_pad)
    scale1, shift1 = _finalize_bn(s1, q1, g1p, b1p, B)

    # ---------------- pass 3: folded BN1 + gelu (+ residual) ----------------
    in_specs3 = [
        pl.BlockSpec((tb, fout), lambda i: (i, 0)),        # y_pre tile
        pl.BlockSpec((1, fout), lambda i: (0, 0)),         # BN1 scale resident
        pl.BlockSpec((1, fout), lambda i: (0, 0)),         # BN1 shift resident
    ]
    args3 = [ypre, scale1, shift1]
    if residual:
        in_specs3.append(pl.BlockSpec((tb, fin), lambda i: (i, 0)))  # x tile
        args3.append(xp)

    out_padded = pl.pallas_call(
        functools.partial(_pass3_kernel, residual=residual),
        grid=(nb,),
        in_specs=in_specs3,
        out_specs=pl.BlockSpec((tb, fout), lambda i: (i, 0)),
        out_shape=jax.ShapeDtypeStruct((bpad, fout), x.dtype),
        compiler_params=pltpu.CompilerParams(
            dimension_semantics=("parallel",), vmem_limit_bytes=budget),
        cost_estimate=pl.CostEstimate(
            flops=10 * bpad * fout,
            transcendentals=bpad * fout,
            bytes_accessed=4 * bpad * fout
            + (isz * bpad * fin if residual else 0) + osz * bpad * fout),
    )(*args3)

    return out_padded[:B, :nout]


# ---------------- pure-JAX reference (unpadded, full-batch BN) ----------------
def mlp_reference(x, w0, g0, b0, w1, g1, b1):
    xf = x.astype(jnp.float32)

    def bn(h, g, b):
        mean = jnp.mean(h, axis=0, keepdims=True)
        var = jnp.mean((h - mean) ** 2, axis=0, keepdims=True)
        return (h - mean) * lax.rsqrt(var + BN_EPS) * g.reshape(1, -1) \
            + b.reshape(1, -1)

    h = _gelu_exact(bn(xf @ w0.astype(jnp.float32), g0, b0))
    y = _gelu_exact(bn(h @ w1.astype(jnp.float32), g1, b1))
    if x.shape[1] == w1.shape[1]:
        y = y + xf
    return y.astype(x.dtype)


if __name__ == "__main__":
    key = jax.random.PRNGKey(0)

    def run_case(B, NIN, NOUT, k):
        kx, k0, k1, kg0, kb0, kg1, kb1 = jax.random.split(k, 7)
        x = jax.random.normal(kx, (B, NIN), dtype=jnp.float32)
        w0 = jax.random.normal(k0, (NIN, NIN), dtype=jnp.float32) * (1.0 / jnp.sqrt(NIN))
        w1 = jax.random.normal(k1, (NIN, NOUT), dtype=jnp.float32) * (1.0 / jnp.sqrt(NIN))
        g0 = 1.0 + 0.1 * jax.random.normal(kg0, (NIN,), dtype=jnp.float32)
        b0 = 0.1 * jax.random.normal(kb0, (NIN,), dtype=jnp.float32)
        g1 = 1.0 + 0.1 * jax.random.normal(kg1, (NOUT,), dtype=jnp.float32)
        b1 = 0.1 * jax.random.normal(kb1, (NOUT,), dtype=jnp.float32)

        out = jax.block_until_ready(mlp_forward(x, w0, g0, b0, w1, g1, b1))
        ref = mlp_reference(x, w0, g0, b0, w1, g1, b1)
        assert out.shape == ref.shape
        assert jnp.allclose(out, ref, atol=2e-4, rtol=2e-4), \
            f"mismatch vs JAX reference (B={B}, NIN={NIN}, NOUT={NOUT})"

    ka, kb = jax.random.split(key)
    # residual path (nin == nout); B not a multiple of 8 -> padded-row BN1 correction
    run_case(12, 32, 32, ka)
    # non-residual path (nin != nout) -> x tile dropped from pass 3 specs
    run_case(16, 32, 64, kb)
    print("KERNEL_OK")
</pallas_src>

<mosaic_0001>
module attributes {stable_mosaic.version = 11 : i64} {
  func.func @_pass1_kernel(%arg0: i32, %arg1: memref<16x128xf32, #tpu.memory_space<vmem>>, %arg2: memref<128x128xf32, #tpu.memory_space<vmem>>, %arg3: memref<8x128xf32, #tpu.memory_space<vmem>>) attributes {dimension_semantics = [#tpu.dimension_semantics<parallel>], iteration_bounds = array<i64: 1>, scalar_prefetch = 0 : i64, scratch_operands = 0 : i64, tpu.core_type = #tpu.core_type<tc>, window_params = [{transform_indices = @transform_0, window_bounds = array<i64: 16, 128>}, {pipeline_mode = #tpu.pipeline_mode<synchronous>, transform_indices = @transform_1, window_bounds = array<i64: 128, 128>}, {transform_indices = @transform_2, window_bounds = array<i64: 8, 128>}]} {
    %c0 = arith.constant 0 : index
    %c0_0 = arith.constant 0 : index
    %0 = vector.load %arg1[%c0, %c0_0] : memref<16x128xf32, #tpu.memory_space<vmem>>, vector<16x128xf32>
    %c0_1 = arith.constant 0 : index
    %c0_2 = arith.constant 0 : index
    %1 = vector.load %arg2[%c0_1, %c0_2] : memref<128x128xf32, #tpu.memory_space<vmem>>, vector<128x128xf32>
    %cst = arith.constant dense<0.000000e+00> : vector<16x128xf32>
    %2 = tpu.matmul %0, %1, %cst {dimension_numbers = #tpu.dot_dimension_numbers<[1], [0], [0], [1], [0, 0, 1, 1], [], []>} : vector<16x128xf32>, vector<128x128xf32>, vector<16x128xf32> -> vector<16x128xf32>
    %cst_3 = arith.constant dense<0.000000e+00> : vector<128xf32>
    %3 = vector.multi_reduction <add>, %2, %cst_3 [0] : vector<16x128xf32> to vector<128xf32>
    %4 = vector.shape_cast %3 : vector<128xf32> to vector<1x128xf32>
    %5 = arith.mulf %2, %2 : vector<16x128xf32>
    %cst_4 = arith.constant dense<0.000000e+00> : vector<128xf32>
    %6 = vector.multi_reduction <add>, %5, %cst_4 [0] : vector<16x128xf32> to vector<128xf32>
    %7 = vector.shape_cast %6 : vector<128xf32> to vector<1x128xf32>
    %cst_5 = arith.constant 0.000000e+00 : f32
    %8 = vector.broadcast %cst_5 : f32 to vector<6x128xf32>
    %9 = tpu.concatenate %4, %7, %8 in 0 : vector<1x128xf32>, vector<1x128xf32>, vector<6x128xf32> -> vector<8x128xf32>
    %c0_6 = arith.constant 0 : index
    %c0_7 = arith.constant 0 : index
    %10 = vector.load %arg3[%c0_6, %c0_7] : memref<8x128xf32, #tpu.memory_space<vmem>>, vector<8x128xf32>
    tpu.vector_store %arg3[%c0_6, %c0_7], %9 {strides = array<i32>} : memref<8x128xf32, #tpu.memory_space<vmem>>, vector<8x128xf32>,
    return
  }
  func.func @transform_0(%arg0: i32) -> (i32, i32) {
    %c0_i32 = arith.constant 0 : i32
    %c0_i32_0 = arith.constant 0 : i32
    return %arg0, %c0_i32 : i32, i32
  }
  func.func @transform_1(%arg0: i32) -> (i32, i32) {
    %c0_i32 = arith.constant 0 : i32
    %c0_i32_0 = arith.constant 0 : i32
    %c0_i32_1 = arith.constant 0 : i32
    return %c0_i32, %c0_i32_0 : i32, i32
  }
  func.func @transform_2(%arg0: i32) -> (i32, i32) {
    %c0_i32 = arith.constant 0 : i32
    %c0_i32_0 = arith.constant 0 : i32
    return %arg0, %c0_i32 : i32, i32
  }
}

</mosaic_0001>

<llo_original>
// kernel: tpu_custom_call.1
$region0: #{tpu_custom_call.1}
  #allocation0 [shape = 'u32[]', space=smem, size = 0x4, offset = 0x4, fixed_abs, tag = 'smem constant byte address 0x4 - core index']
  #allocation1 [shape = 'u32[72,128]{1,0:T(1,128)}', space=vmem, size = 0x9000, scoped, tag = 'internal scratch']
  %s0 = inlined_call_operand.hbm [shape: f32[16,128], index: 0, kind: input, shape index: {}]
  %s1 = inlined_call_operand.hbm [shape: f32[128,128], index: 1, kind: input, shape index: {}]
  %s2 = inlined_call_operand.hbm [shape: f32[8,128], index: 2, kind: output, shape index: {}]
  %s3 = sld [smem:[#allocation0]]
  $region26: #{tpu_custom_call.1} parent=0
    _
  %s5 = ssub.s32 1, %s3
  %s6 = scalar_select 0, %s5, %s3
  $region1: #{tpu_custom_call.1} parent=0
    #allocation2 [shape = 'u8[8192]{0}', space=vmem, size = 0x2000, scoped, tag = 'input window, operand 0, single buffered']
    #allocation3 [shape = 's32[1]{0}', space=sflag, size = 0x4, scoped, tag = 'scoped memory for tpu_custom_call.1']
    #allocation4 [shape = 's32[1]{0}', space=sflag, size = 0x4, scoped, tag = 'scoped memory for tpu_custom_call.1']
    #allocation5 [shape = 'u8[65536]{0}', space=vmem, size = 0x10000, scoped, tag = 'input window, operand 1, single buffered']
    #allocation6 [shape = 's32[1]{0}', space=sflag, size = 0x4, scoped, tag = 'scoped memory for tpu_custom_call.1']
    #allocation7 [shape = 'u8[4096]{0}', space=vmem, size = 0x1000, scoped, tag = 'output window, operand 0, single buffered']
    %7 = vsyncpa [#allocation3], 0
    %8 = vsyncpa [#allocation6], 0
    %9 = vsyncpa [#allocation4], 0
    // Predicated region
    $region2: #{tpu_custom_call.1} parent=1 // pred_check
      _
    $region3: #{tpu_custom_call.1} parent=1 // pred_check_branch
      %11 = sbr.rel (0) target = $region5
    $region4: #{tpu_custom_call.1} parent=1 // pred_region
      %13 = vsyncadd [#allocation3], 0
      %s14 = sshll.u32 %s0, 4
      %s15 = int_to_ptr.hbm [resolvable:$true] %s14
      %s16 = sshll.u32 [#allocation2], 4
      %s17 = int_to_ptr.vmem [resolvable:$true] %s16
      %22 = dma.hbm_to_vmem [thread:$0]  %s15, 256, %s17, [#allocation3], 128, 128, 8
    $region5: #{tpu_custom_call.1} parent=1 // pred_fallthru
      _
    // Predicated region
    $region6: #{tpu_custom_call.1} parent=1 // pred_check
      _
    $region7: #{tpu_custom_call.1} parent=1 // pred_check_branch
      %24 = sbr.rel (0) target = $region9
    $region8: #{tpu_custom_call.1} parent=1 // pred_region
      %26 = vsyncadd [#allocation6], 0
      %s27 = sshll.u32 %s1, 4
      %s28 = int_to_ptr.hbm [resolvable:$true] %s27
      %s29 = sshll.u32 [#allocation5], 4
      %s30 = int_to_ptr.vmem [resolvable:$true] %s29
      %35 = dma.hbm_to_vmem [thread:$0]  %s28, 2048, %s30, [#allocation6], 128, 128, 8
    $region9: #{tpu_custom_call.1} parent=1 // pred_fallthru
      _
    // Predicated region
    $region10: #{tpu_custom_call.1} parent=1 // pred_check
      _
    $region11: #{tpu_custom_call.1} parent=1 // pred_check_branch
      %37 = sbr.rel (0) target = $region13
    $region12: #{tpu_custom_call.1} parent=1 // pred_region
      %39 = dma.done [#allocation3], 256
    $region13: #{tpu_custom_call.1} parent=1 // pred_fallthru
      _
    // Predicated region
    $region14: #{tpu_custom_call.1} parent=1 // pred_check
      _
    $region15: #{tpu_custom_call.1} parent=1 // pred_check_branch
      %41 = sbr.rel (0) target = $region17
    $region16: #{tpu_custom_call.1} parent=1 // pred_region
      %43 = dma.done [#allocation6], 2048
    $region17: #{tpu_custom_call.1} parent=1 // pred_fallthru
      _
    %v44 = vld [vmem:[#allocation2] sm:$0xff]
    %v45 = vld [vmem:[#allocation2 + $0x8] sm:$0xff]
    %v46 = vld [vmem:[#allocation5] sm:$0xff]
    %v47 = vld [vmem:[#allocation5 + $0x8] sm:$0xff]
    %v48 = vld [vmem:[#allocation5 + $0x10] sm:$0xff]
    %v49 = vld [vmem:[#allocation5 + $0x18] sm:$0xff]
    %v50 = vld [vmem:[#allocation5 + $0x20] sm:$0xff]
    %v51 = vld [vmem:[#allocation5 + $0x28] sm:$0xff]
    %v52 = vld [vmem:[#allocation5 + $0x30] sm:$0xff]
    %v53 = vld [vmem:[#allocation5 + $0x38] sm:$0xff]
    %v54 = vld [vmem:[#allocation5 + $0x40] sm:$0xff]
    %v55 = vld [vmem:[#allocation5 + $0x48] sm:$0xff]
    %v56 = vld [vmem:[#allocation5 + $0x50] sm:$0xff]
    %v57 = vld [vmem:[#allocation5 + $0x58] sm:$0xff]
    %v58 = vld [vmem:[#allocation5 + $0x60] sm:$0xff]
    %v59 = vld [vmem:[#allocation5 + $0x68] sm:$0xff]
    %v60 = vld [vmem:[#allocation5 + $0x70] sm:$0xff]
    %v61 = vld [vmem:[#allocation5 + $0x78] sm:$0xff]
    %62 = vmatpush.msra.mxu0 %v61
    %63 = vmatpush.msra.mxu0 %v60
    %64 = vmatpush.msra.mxu0 %v59
    %65 = vmatpush.msra.mxu0 %v58
    %66 = vmatpush.msra.mxu0 %v57
    %67 = vmatpush.msra.mxu0 %v56
    %68 = vmatpush.msra.mxu0 %v55
    %69 = vmatpush.msra.mxu0 %v54
    %70 = vmatpush.msra.mxu0 %v53
    %71 = vmatpush.msra.mxu0 %v52
    %72 = vmatpush.msra.mxu0 %v51
    %73 = vmatpush.msra.mxu0 %v50
    %74 = vmatpush.msra.mxu0 %v49
    %75 = vmatpush.msra.mxu0 %v48
    %76 = vmatpush.msra.mxu0 %v47
    %77 = vmatpush.msra.mxu0 %v46
    %78 = vmatmul.f32.gmra.mxu0 %v44
    %v79 = vpop.f32.mrf.mxu0
    %v80 = vadd.f32 0.0, %v79
    %81 = vmatmul.f32.gmra.mxu0 %v45
    %v82 = vpop.f32.mrf.mxu0
    %v83 = vadd.f32 0.0, %v82
    %84 = vdwg.mxu0
    %v85 = vadd.f32 %v80, %v83
    %v86 = vrot.slane %v85, 4
    %v87 = vadd.f32 %v85, %v86
    %v88 = vrot.slane %v87, 2
    %v89 = vadd.f32 %v87, %v88
    %v90 = vrot.slane %v89, 1
    %v91 = vadd.f32 %v89, %v90
    %v92 = vmul.f32 %v80, %v80
    %v93 = vmul.f32 %v83, %v83
    %v94 = vadd.f32 %v92, %v93
    %v95 = vrot.slane %v94, 4
    %v96 = vadd.f32 %v94, %v95
    %v97 = vrot.slane %v96, 2
    %v98 = vadd.f32 %v96, %v97
    %v99 = vrot.slane %v98, 1
    %v100 = vadd.f32 %v98, %v99
    %vm101 = vcmask 1040384
    %v102 = vsel %vm101, %v91, %v100
    %vm103 = vcmask 1041408
    %v104 = vsel %vm103, %v102, 0.0
    %105 = vst [vmem:[#allocation7] sm:$0xff] %v104
    // Predicated region
    $region18: #{tpu_custom_call.1} parent=1 // pred_check
      _
    $region19: #{tpu_custom_call.1} parent=1 // pred_check_branch
      %107 = sbr.rel (0) target = $region21
    $region20: #{tpu_custom_call.1} parent=1 // pred_region
      %109 = vsyncadd [#allocation4], 0
      %s111 = sshll.u32 [#allocation7], 4
      %s112 = int_to_ptr.vmem [resolvable:$true] %s111
      %s113 = sshll.u32 %s2, 4
      %s114 = int_to_ptr.hbm [resolvable:$true] %s113
      %116 = dma.vmem_to_hbm [thread:$0]  %s112, 128, %s114, [#allocation4]
    $region21: #{tpu_custom_call.1} parent=1 // pred_fallthru
      _
    // Predicated region
    $region22: #{tpu_custom_call.1} parent=1 // pred_check
      _
    $region23: #{tpu_custom_call.1} parent=1 // pred_check_branch
      %118 = sbr.rel (0) target = $region25
    $region24: #{tpu_custom_call.1} parent=1 // pred_region
      %120 = dma.done [#allocation4], 128
    $region25: #{tpu_custom_call.1} parent=1 // pred_fallthru
      _
    %121 = vsyncpa [#allocation3], 1
    %122 = vsyncpa [#allocation6], 1
    %123 = vsyncpa [#allocation4], 1

</llo_original>
